<compile_context>
chip_gen: v5e
topology: v5e:2x2
jax: 0.10.0
libtpu: 0.0.40
codegen_flags: <defaults>
</compile_context>

<pallas_src>
from functools import lru_cache

import numpy as np
import jax
import jax.numpy as jnp
from jax.experimental import pallas as pl
from jax.experimental.pallas import tpu as pltpu

_LANES = 128
_SUBLANES = 8


# ---------------------------------------------------------------------------
# Host-side glue: Hilbert decode (Skilling, "Programming the Hilbert curve"),
# bit-for-bit the same ordering as `hilbert.decode(S, D, byte_size)`.
# ---------------------------------------------------------------------------
def hilbert_decode(S, num_dims: int, num_bits: int) -> np.ndarray:
    """Vectorized Skilling decode: Hilbert indices (N,) -> coordinates (N, D)."""
    S = np.asarray(S, dtype=np.int64).ravel()
    n, b = int(num_dims), int(num_bits)
    X = np.zeros((S.shape[0], n), dtype=np.int64)
    # De-interleave: MSB of S -> MSB of X[:,0], next bit -> MSB of X[:,1], ...
    for k in range(n * b):
        bit = (S >> (n * b - 1 - k)) & 1
        X[:, k % n] |= bit << (b - 1 - (k // n))
    # Gray decode (H ^ (H >> 1), done in transpose form).
    t = X[:, n - 1] >> 1
    for i in range(n - 1, 0, -1):
        X[:, i] ^= X[:, i - 1]
    X[:, 0] ^= t
    # Undo excess work.
    Q = 2
    while Q != (2 << (b - 1)):
        P = Q - 1
        for i in range(n - 1, -1, -1):
            cond = (X[:, i] & Q) != 0
            t_ex = (X[:, 0] ^ X[:, i]) & P
            x0_new = np.where(cond, X[:, 0] ^ P, X[:, 0] ^ t_ex)
            xi_new = np.where(cond, X[:, i], X[:, i] ^ t_ex)
            X[:, i] = xi_new          # write X[:, i] first so i == 0 stays correct
            X[:, 0] = x0_new
        Q <<= 1
    return X


def _hilbert_decode_scalar(h: int, num_dims: int, num_bits: int):
    """Per-element reference decode (used only to cross-check the test)."""
    n, b = num_dims, num_bits
    X = [0] * n
    for k in range(n * b):
        bit = (h >> (n * b - 1 - k)) & 1
        X[k % n] |= bit << (b - 1 - (k // n))
    t = X[n - 1] >> 1
    for i in range(n - 1, 0, -1):
        X[i] ^= X[i - 1]
    X[0] ^= t
    Q = 2
    while Q != (2 << (b - 1)):
        P = Q - 1
        for i in range(n - 1, -1, -1):
            if X[i] & Q:
                X[0] ^= P
            else:
                t = (X[0] ^ X[i]) & P
                X[0] ^= t
                X[i] ^= t
        Q <<= 1
    return X


def hilbert_flatten_indices(shape, byte_size: int = 8) -> np.ndarray:
    """Flat (row-major) gather indices realizing hilbert_flatten(array)."""
    D = len(shape)
    N = int(np.prod(shape))
    L = hilbert_decode(np.arange(N), D, byte_size)                 # (N, D)
    # np.ravel_multi_index raises if the curve leaves the array bounds,
    # mirroring the reference module's index error for non-hypercube inputs.
    return np.ravel_multi_index(tuple(L.T), shape).astype(np.int32)


# ---------------------------------------------------------------------------
# Host-side tiling plan: output tiles, input windows (Hilbert locality).
# ---------------------------------------------------------------------------
_PLAN_CACHE = {}


def _gather_plan(shape, byte_size: int, chunk_target: int = 512):
    key = (tuple(shape), int(byte_size), int(chunk_target))
    if key in _PLAN_CACHE:
        return _PLAN_CACHE[key]

    N = int(np.prod(shape))
    assert N >= 1 and len(shape) >= 1
    lin = hilbert_flatten_indices(shape, byte_size)                # (N,) int32

    R = -(-N // _LANES)                                            # output rows
    Np = R * _LANES
    TR = _SUBLANES if R % _SUBLANES == 0 else R                    # rows per out tile
    TILE = TR * _LANES
    num_tiles = Np // TILE

    CHUNK = chunk_target                                           # input window chunk
    while Np % CHUNK:
        CHUNK //= 2                                                # 512 -> 256 -> 128
    n_chunks = Np // CHUNK

    # Pad the index stream; pads reuse the last real index so they never widen
    # a window (their gathered value is sliced off again at the end).
    lin_p = np.concatenate([lin, np.full((Np - N,), lin[-1], np.int32)])
    per_tile = lin_p.reshape(num_tiles, TILE)
    cmin = per_tile.min(axis=1) // CHUNK
    cmax = per_tile.max(axis=1) // CHUNK
    WC = int((cmax - cmin + 1).max())                              # grid extent (chunks)
    base = np.minimum(cmin, n_chunks - WC).astype(np.int32)        # per-tile window start
    wc = (cmax - base + 1).astype(np.int32)                        # per-tile used chunks
    rel = (lin_p.astype(np.int64) - np.repeat(base.astype(np.int64), TILE) * CHUNK)
    plan = dict(N=N, Np=Np, R=R, TR=TR, CHUNK=CHUNK, WC=WC, num_tiles=num_tiles,
                base=base, wc=wc, idx2d=rel.astype(np.int32).reshape(R, _LANES))
    _PLAN_CACHE[key] = plan
    return plan


# ---------------------------------------------------------------------------
# Pallas kernel: windowed permutation gather (one-hot matmul per input chunk).
# ---------------------------------------------------------------------------
def _make_gather_kernel(TR: int, CHUNK: int):
    def kernel(base_ref, wc_ref, idx_ref, x_ref, o_ref):
        # base_ref / wc_ref: (num_tiles,) int32 in SMEM (scalar prefetch).
        # idx_ref: (TR, 128) int32 window-relative source indices of this tile.
        # x_ref:   (1, CHUNK) window chunk w of the flat input (lane-dense).
        # o_ref:   (TR, 128)  output tile (sublane + lane dense).
        t = pl.program_id(0)
        w = pl.program_id(1)

        @pl.when(w == 0)
        def _init():
            o_ref[...] = jnp.zeros_like(o_ref)

        # Chunks past this tile's window are clamped repeats of the last useful
        # chunk (see the x index_map) -- skip their compute entirely.
        @pl.when(w < wc_ref[t])
        def _accumulate():
            xc = x_ref[...]                                        # (1, CHUNK)
            rel = idx_ref[...] - w * CHUNK                         # (TR, 128)
            kio = jax.lax.broadcasted_iota(jnp.int32, (CHUNK, _LANES), 0)
            for s in range(TR):                                    # static unroll (TR <= 8)
                onehot = (kio == rel[s:s + 1, :]).astype(xc.dtype)  # (CHUNK, 128)
                o_ref[s:s + 1, :] += jnp.dot(
                    xc, onehot, preferred_element_type=jnp.float32
                ).astype(o_ref.dtype)

    return kernel


@lru_cache(maxsize=None)
def _build_gather_call(R, TR, CHUNK, WC, num_tiles, dtype_name):
    dtype = jnp.dtype(dtype_name)
    call = pl.pallas_call(
        _make_gather_kernel(TR, CHUNK),
        out_shape=jax.ShapeDtypeStruct((R, _LANES), dtype),
        grid_spec=pltpu.PrefetchScalarGridSpec(
            num_scalar_prefetch=2,
            grid=(num_tiles, WC),
            in_specs=[
                # Window-relative gather indices of this output tile.
                pl.BlockSpec((TR, _LANES), lambda t, w, b, c: (t, 0)),
                # Input window chunk: start comes from the prefetched per-tile
                # base; clamp so exhausted windows reuse the previous block
                # (no redundant DMA for skipped chunks).
                pl.BlockSpec((1, CHUNK),
                             lambda t, w, b, c: (0, b[t] + jnp.minimum(w, c[t] - 1))),
            ],
            out_specs=pl.BlockSpec((TR, _LANES), lambda t, w, b, c: (t, 0)),
        ),
        compiler_params=pltpu.CompilerParams(
            dimension_semantics=("parallel", "arbitrary")),
    )
    return jax.jit(call)


def _gather_float(x_flat: jax.Array, plan) -> jax.Array:
    """Permutation-gather a flat floating-point array along the Hilbert order."""
    assert jnp.issubdtype(x_flat.dtype, jnp.floating)
    N, Np, R = plan["N"], plan["Np"], plan["R"]
    x_pad = jnp.pad(x_flat, (0, Np - N)).reshape(1, Np)            # lane-dense slab
    fn = _build_gather_call(R, plan["TR"], plan["CHUNK"], plan["WC"],
                            plan["num_tiles"], str(x_flat.dtype))
    out = fn(jnp.asarray(plan["base"]), jnp.asarray(plan["wc"]),
             jnp.asarray(plan["idx2d"]), x_pad)
    return out.reshape(Np)[:N]


def hilbert_flatten(x: jax.Array, byte_size: int = 8) -> jax.Array:
    """Pallas equivalent of HilbertFlatten().forward(x)."""
    shape = tuple(x.shape)
    N = int(np.prod(shape))
    plan = _gather_plan(shape, byte_size)
    x_flat = x.reshape(N)
    dt = x.dtype

    if jnp.issubdtype(dt, jnp.floating):
        return _gather_float(x_flat, plan)

    if dt == jnp.bool_:
        return _gather_float(x_flat.astype(jnp.float32), plan).astype(dt)

    if jnp.issubdtype(dt, jnp.integer):
        bits = jnp.iinfo(dt).bits
        if bits > 32:
            raise NotImplementedError("64-bit integer inputs are not supported on TPU")
        # Exact integer path: gather 8-bit planes (each exactly representable
        # even under reduced-precision matmul) and recombine.
        # TODO(synk): replace with a dedicated non-MXU integer gather kernel.
        xi = x_flat.astype(jnp.int32)
        n_planes = (bits + 7) // 8
        planes = []
        for k in range(n_planes):
            c = xi >> (8 * k)
            if k != n_planes - 1:
                c = c & 0xFF
            planes.append(_gather_float(c.astype(jnp.float32), plan).astype(jnp.int32))
        out = planes[-1] << (8 * (n_planes - 1))
        for k in range(n_planes - 2, -1, -1):
            out = out | ((planes[k] & 0xFF) << (8 * k))
        return out.astype(dt)

    raise NotImplementedError(f"unsupported dtype {dt}")


if __name__ == "__main__":
    key = jax.random.PRNGKey(0)
    k1, k2, k3, k4 = jax.random.split(key, 4)

    cases = [
        ("f32 16x16", jax.random.normal(k1, (16, 16), dtype=jnp.float32)),
        ("f32 64x64 (multi-tile, windowed)",
         jax.random.normal(k2, (64, 64), dtype=jnp.float32)),
        ("f32 8x8x8 (3-D)", jax.random.normal(k3, (8, 8, 8), dtype=jnp.float32)),
        ("int32 16x16 (exact, |v| > 2^24)",
         jax.random.randint(k4, (16, 16), -(2 ** 28), 2 ** 28, dtype=jnp.int32)),
    ]

    for name, arr in cases:
        y = jax.block_until_ready(hilbert_flatten(arr))
        arr_np = np.asarray(arr)
        # Independent reference: per-element Skilling decode + numpy fancy index,
        # mirroring the PyTorch module's hilbert_flatten exactly.
        L = np.asarray([_hilbert_decode_scalar(h, arr_np.ndim, 8)
                        for h in range(arr_np.size)])
        ref = arr_np[tuple(L.T)]
        assert y.shape == ref.shape and y.dtype == arr_np.dtype, name
        if np.issubdtype(arr_np.dtype, np.floating):
            np.testing.assert_allclose(np.asarray(y), ref, rtol=1e-6, atol=1e-6,
                                       err_msg=name)
        else:
            np.testing.assert_array_equal(np.asarray(y), ref, err_msg=name)

    print("KERNEL_OK")
</pallas_src>

<mosaic_0001>
module attributes {stable_mosaic.version = 11 : i64} {
  func.func @kernel(%arg0: i32, %arg1: i32, %arg2: memref<1xi32, #tpu.memory_space<smem>>, %arg3: memref<1xi32, #tpu.memory_space<smem>>, %arg4: memref<2x128xi32, #tpu.memory_space<vmem>>, %arg5: memref<1x256xf32, #tpu.memory_space<vmem>>, %arg6: memref<2x128xf32, #tpu.memory_space<vmem>>) attributes {dimension_semantics = [#tpu.dimension_semantics<parallel>, #tpu.dimension_semantics<arbitrary>], iteration_bounds = array<i64: 1, 1>, scalar_prefetch = 2 : i64, scratch_operands = 0 : i64, tpu.core_type = #tpu.core_type<tc>, window_params = [{transform_indices = @transform_0, window_bounds = array<i64: 2, 128>}, {transform_indices = @transform_1, window_bounds = array<i64: 1, 256>}, {transform_indices = @transform_2, window_bounds = array<i64: 2, 128>}]} {
    %c0_i32 = arith.constant 0 : i32
    %0 = arith.cmpi eq, %arg1, %c0_i32 : i32
    %1 = arith.extui %0 : i1 to i32
    %c0_i32_0 = arith.constant 0 : i32
    %2 = arith.cmpi ne, %1, %c0_i32_0 : i32
    scf.if %2 {
      %cst = arith.constant 0.000000e+00 : f32
      %8 = vector.broadcast %cst : f32 to vector<2x128xf32>
      %c0 = arith.constant 0 : index
      %c0_2 = arith.constant 0 : index
      %9 = vector.load %arg6[%c0, %c0_2] : memref<2x128xf32, #tpu.memory_space<vmem>>, vector<2x128xf32>
      tpu.vector_store %arg6[%c0, %c0_2], %8 {strides = array<i32>} : memref<2x128xf32, #tpu.memory_space<vmem>>, vector<2x128xf32>,
    } else {
    }
    %3 = arith.index_cast %arg0 : i32 to index
    %4 = memref.load %arg3[%3] : memref<1xi32, #tpu.memory_space<smem>>
    %5 = arith.cmpi slt, %arg1, %4 : i32
    %6 = arith.extui %5 : i1 to i32
    %c0_i32_1 = arith.constant 0 : i32
    %7 = arith.cmpi ne, %6, %c0_i32_1 : i32
    scf.if %7 {
      %c0 = arith.constant 0 : index
      %c0_2 = arith.constant 0 : index
      %8 = vector.load %arg5[%c0, %c0_2] : memref<1x256xf32, #tpu.memory_space<vmem>>, vector<1x256xf32>
      %c0_3 = arith.constant 0 : index
      %c0_4 = arith.constant 0 : index
      %9 = vector.load %arg4[%c0_3, %c0_4] : memref<2x128xi32, #tpu.memory_space<vmem>>, vector<2x128xi32>
      %c256_i32 = arith.constant 256 : i32
      %10 = arith.muli %arg1, %c256_i32 : i32
      %11 = vector.broadcast %10 : i32 to vector<2x128xi32>
      %12 = arith.subi %9, %11 : vector<2x128xi32>
      %13 = tpu.iota {dimensions = array<i32: 0>} : vector<256x128xi32>
      %14 = vector.extract_strided_slice %12 {offsets = [0, 0], sizes = [1, 128], strides = [1, 1]} : vector<2x128xi32> to vector<1x128xi32>
      %15 = vector.broadcast %14 : vector<1x128xi32> to vector<256x128xi32>
      %16 = arith.cmpi eq, %13, %15 : vector<256x128xi32>
      %17 = arith.extui %16 : vector<256x128xi1> to vector<256x128xi32>
      %18 = arith.sitofp %17 : vector<256x128xi32> to vector<256x128xf32>
      %c0_5 = arith.constant 0 : index
      %c0_6 = arith.constant 0 : index
      %19 = vector.load %arg6[%c0_5, %c0_6] : memref<2x128xf32, #tpu.memory_space<vmem>>, vector<1x128xf32>
      %cst = arith.constant dense<0.000000e+00> : vector<1x128xf32>
      %20 = tpu.matmul %8, %18, %cst {dimension_numbers = #tpu.dot_dimension_numbers<[1], [0], [0], [1], [0, 0, 1, 1], [], []>} : vector<1x256xf32>, vector<256x128xf32>, vector<1x128xf32> -> vector<1x128xf32>
      %21 = arith.addf %19, %20 : vector<1x128xf32>
      %c0_7 = arith.constant 0 : index
      %c0_8 = arith.constant 0 : index
      %22 = vector.load %arg6[%c0_7, %c0_8] : memref<2x128xf32, #tpu.memory_space<vmem>>, vector<1x128xf32>
      tpu.vector_store %arg6[%c0_7, %c0_8], %21 {strides = array<i32>} : memref<2x128xf32, #tpu.memory_space<vmem>>, vector<1x128xf32>,
      %23 = vector.extract_strided_slice %12 {offsets = [1, 0], sizes = [1, 128], strides = [1, 1]} : vector<2x128xi32> to vector<1x128xi32>
      %24 = vector.broadcast %23 : vector<1x128xi32> to vector<256x128xi32>
      %25 = arith.cmpi eq, %13, %24 : vector<256x128xi32>
      %26 = arith.extui %25 : vector<256x128xi1> to vector<256x128xi32>
      %27 = arith.sitofp %26 : vector<256x128xi32> to vector<256x128xf32>
      %c1 = arith.constant 1 : index
      %c0_9 = arith.constant 0 : index
      %28 = vector.load %arg6[%c1, %c0_9] : memref<2x128xf32, #tpu.memory_space<vmem>>, vector<1x128xf32>
      %cst_10 = arith.constant dense<0.000000e+00> : vector<1x128xf32>
      %29 = tpu.matmul %8, %27, %cst_10 {dimension_numbers = #tpu.dot_dimension_numbers<[1], [0], [0], [1], [0, 0, 1, 1], [], []>} : vector<1x256xf32>, vector<256x128xf32>, vector<1x128xf32> -> vector<1x128xf32>
      %30 = arith.addf %28, %29 : vector<1x128xf32>
      %c1_11 = arith.constant 1 : index
      %c0_12 = arith.constant 0 : index
      %31 = vector.load %arg6[%c1_11, %c0_12] : memref<2x128xf32, #tpu.memory_space<vmem>>, vector<1x128xf32>
      tpu.vector_store %arg6[%c1_11, %c0_12], %30 {strides = array<i32>} : memref<2x128xf32, #tpu.memory_space<vmem>>, vector<1x128xf32>,
    } else {
    }
    return
  }
  func.func @transform_0(%arg0: i32, %arg1: i32, %arg2: memref<1xi32, #tpu.memory_space<smem>>, %arg3: memref<1xi32, #tpu.memory_space<smem>>) -> (i32, i32) {
    %c0_i32 = arith.constant 0 : i32
    %c0_i32_0 = arith.constant 0 : i32
    return %arg0, %c0_i32 : i32, i32
  }
  func.func @transform_1(%arg0: i32, %arg1: i32, %arg2: memref<1xi32, #tpu.memory_space<smem>>, %arg3: memref<1xi32, #tpu.memory_space<smem>>) -> (i32, i32) {
    %0 = arith.index_cast %arg0 : i32 to index
    %1 = memref.load %arg2[%0] : memref<1xi32, #tpu.memory_space<smem>>
    %2 = arith.index_cast %arg0 : i32 to index
    %3 = memref.load %arg3[%2] : memref<1xi32, #tpu.memory_space<smem>>
    %c1_i32 = arith.constant 1 : i32
    %4 = arith.subi %3, %c1_i32 : i32
    %5 = arith.minsi %arg1, %4 : i32
    %6 = arith.addi %1, %5 : i32
    %c0_i32 = arith.constant 0 : i32
    %c0_i32_0 = arith.constant 0 : i32
    return %c0_i32, %6 : i32, i32
  }
  func.func @transform_2(%arg0: i32, %arg1: i32, %arg2: memref<1xi32, #tpu.memory_space<smem>>, %arg3: memref<1xi32, #tpu.memory_space<smem>>) -> (i32, i32) {
    %c0_i32 = arith.constant 0 : i32
    %c0_i32_0 = arith.constant 0 : i32
    return %arg0, %c0_i32 : i32, i32
  }
}

</mosaic_0001>

<llo_original>
// kernel: tpu_custom_call.1
$region0: #{tpu_custom_call.1}
  #allocation0 [shape = 'u32[]', space=smem, size = 0x4, offset = 0x4, fixed_abs, tag = 'smem constant byte address 0x4 - core index']
  #allocation1 [shape = 'u32[72,128]{1,0:T(1,128)}', space=vmem, size = 0x9000, scoped, tag = 'internal scratch']
  #allocation2 [shape = 's32[1]{0}', space=sflag, size = 0x4, scoped, tag = 'scoped memory for tpu_custom_call.1']
  #allocation3 [shape = 's32[1]{0:T(128)S(6)}', space=smem, size = 0x200, scoped, tag = 'prefetched SMEM operand 0']
  #allocation4 [shape = 's32[1]{0:T(128)S(6)}', space=smem, size = 0x200, scoped, tag = 'prefetched SMEM operand 1']
  %s0 = inlined_call_operand.<no memory space> [shape: s32[1], index: 0, kind: input, shape index: {}]
  %s1 = inlined_call_operand.<no memory space> [shape: s32[1], index: 1, kind: input, shape index: {}]
  %s2 = inlined_call_operand.vmem [shape: s32[2,128], index: 2, kind: input, shape index: {}]
  %s3 = inlined_call_operand.vmem [shape: f32[1,256], index: 3, kind: input, shape index: {}]
  %s4 = inlined_call_operand.hbm [shape: f32[2,128], index: 4, kind: output, shape index: {}]
  %s5 = sld [smem:[#allocation0]]
  $region26: #{tpu_custom_call.1} parent=0
    _
  %s7 = ssub.s32 1, %s5
  %s8 = scalar_select 0, %s7, %s5
  %9 = sst [smem:[#allocation3]] %s0
  %10 = sst [smem:[#allocation4]] %s1
  $region1: #{tpu_custom_call.1} parent=0
    #allocation5 [shape = 'u8[1024]{0}', space=vmem, size = 0x400, scoped, tag = 'output window, operand 0, single buffered']
    #allocation6 [shape = 's32[1]{0}', space=sflag, size = 0x4, scoped, tag = 'scoped memory for tpu_custom_call.1']
    %11 = vsyncpa [#allocation6], 0
    // Predicated region
    $region2: #{tpu_custom_call.1} parent=1 // pred_check
      _
    $region3: #{tpu_custom_call.1} parent=1 // pred_check_branch
      %13 = sbr.rel (0) target = $region5
    $region4: #{tpu_custom_call.1} parent=1 // pred_region
      _
    $region5: #{tpu_custom_call.1} parent=1 // pred_fallthru
      _
    // Predicated region
    $region6: #{tpu_custom_call.1} parent=1 // pred_check
      _
    $region7: #{tpu_custom_call.1} parent=1 // pred_check_branch
      %15 = sbr.rel (0) target = $region9
    $region8: #{tpu_custom_call.1} parent=1 // pred_region
      %s16 = sld [smem:[#allocation3]]
      %s17 = sld [smem:[#allocation4]]
      %s18 = ssub.s32 %s17, 1
      %p19 = scmp.lt.s32.totalorder 0, %s18
      %s20 = scalar_select %p19, 0, %s18
      %s21 = sadd.s32 %s16, %s20
      %s22 = smul.u32 2, %s21
      %p23 = scmp.lt.s32.totalorder %s22, 1
      %s24 = scalar_select %p23, %s22, 1
      %s25 = scalar_lea.vmem %s3, %s24
      %s26 = sld [smem:[#allocation3]]
      %s27 = sld [smem:[#allocation4]]
      %s28 = ssub.s32 %s27, 1
      %p29 = scmp.lt.s32.totalorder 0, %s28
      %s30 = scalar_select %p29, 0, %s28
      %s31 = sadd.s32 %s26, %s30
      %s32 = smul.u32 2, %s31
    $region9: #{tpu_custom_call.1} parent=1 // pred_fallthru
      _
    %s33 = sld [smem:[#allocation3]]
    %s34 = sld [smem:[#allocation4]]
    %s35 = ssub.s32 %s34, 1
    %p36 = scmp.lt.s32.totalorder 0, %s35
    %s37 = scalar_select %p36, 0, %s35
    %s38 = sadd.s32 %s33, %s37
    %s39 = smul.u32 2, %s38
    %p40 = scmp.lt.s32.totalorder %s39, 1
    %s41 = scalar_select %p40, %s39, 1
    %s42 = scalar_lea.vmem %s3, %s41
    %s43 = sld [smem:[#allocation3]]
    %s44 = sld [smem:[#allocation4]]
    %s45 = ssub.s32 %s44, 1
    %p46 = scmp.lt.s32.totalorder 0, %s45
    %s47 = scalar_select %p46, 0, %s45
    %s48 = sadd.s32 %s43, %s47
    %s49 = smul.u32 2, %s48
    %p50 = scmp.lt.s32.totalorder %s49, 1
    %s51 = scalar_select %p50, %s49, 1
    %s52 = scalar_lea.vmem %s3, %s51
    %s53 = sld [smem:[#allocation3]]
    %s54 = sld [smem:[#allocation4]]
    %s55 = ssub.s32 %s54, 1
    %p56 = scmp.lt.s32.totalorder 0, %s55
    %s57 = scalar_select %p56, 0, %s55
    %s58 = sadd.s32 %s53, %s57
    %s59 = smul.u32 2, %s58
    %p60 = scmp.eq.s32.totalorder 0, 0
    // Predicated region
    $region10: #{tpu_custom_call.1} parent=1 // pred_check
      %p61 = pneg %p60
    $region11: #{tpu_custom_call.1} parent=1 // pred_check_branch
      %63 = sbr.rel (%p61) target = $region13
    $region12: #{tpu_custom_call.1} parent=1 // pred_region
      %64 = vst [vmem:[#allocation5] sm:$0x3] 0.0
    $region13: #{tpu_custom_call.1} parent=1 // pred_fallthru
      _
    %s65 = sld [smem:[#allocation4]]
    %p66 = scmp.lt.s32.totalorder 0, %s65
    // Predicated region
    $region14: #{tpu_custom_call.1} parent=1 // pred_check
      %p67 = pneg %p66
    $region15: #{tpu_custom_call.1} parent=1 // pred_check_branch
      %69 = sbr.rel (%p67) target = $region17
    $region16: #{tpu_custom_call.1} parent=1 // pred_region
      %v70 = vld [vmem:[%s52] sm:$0x3]
      %v71 = vld [vmem:[%s2] sm:$0x3]
      %s72 = smul.u32 0, 256
      %v73 = vstv %s72
      %v74 = vsub.s32 %v71, %v73
      %v75 = vlaneseq
      %v76 = vshrl.u32 %v75, 7
      %v77 = vadd.s32 %v76, 8
      %v78 = vadd.s32 %v76, 16
      %v79 = vadd.s32 %v76, 24
      %v80 = vadd.s32 %v76, 32
      %v81 = vadd.s32 %v76, 40
      %v82 = vadd.s32 %v76, 48
      %v83 = vadd.s32 %v76, 56
      %v84 = vadd.s32 %v76, 64
      %v85 = vadd.s32 %v76, 72
      %v86 = vadd.s32 %v76, 80
      %v87 = vadd.s32 %v76, 88
      %v88 = vadd.s32 %v76, 96
      %v89 = vadd.s32 %v76, 104
      %v90 = vadd.s32 %v76, 112
      %v91 = vadd.s32 %v76, 120
      %v92 = vadd.s32 %v76, 128
      %v93 = vadd.s32 %v76, 136
      %v94 = vadd.s32 %v76, 144
      %v95 = vadd.s32 %v76, 152
      %v96 = vadd.s32 %v76, 160
      %v97 = vadd.s32 %v76, 168
      %v98 = vadd.s32 %v76, 176
      %v99 = vadd.s32 %v76, 184
      %v100 = vadd.s32 %v76, 192
      %v101 = vadd.s32 %v76, 200
      %v102 = vadd.s32 %v76, 208
      %v103 = vadd.s32 %v76, 216
      %v104 = vadd.s32 %v76, 224
      %v105 = vadd.s32 %v76, 232
      %v106 = vadd.s32 %v76, 240
      %v107 = vadd.s32 %v76, 248
      %v108 = vperm.slane %v74, 0
      %vm109 = vcmp.eq.s32.totalorder %v76, %v108
      %vm110 = vcmp.eq.s32.totalorder %v77, %v108
      %vm111 = vcmp.eq.s32.totalorder %v78, %v108
      %vm112 = vcmp.eq.s32.totalorder %v79, %v108
      %vm113 = vcmp.eq.s32.totalorder %v80, %v108
      %vm114 = vcmp.eq.s32.totalorder %v81, %v108
      %vm115 = vcmp.eq.s32.totalorder %v82, %v108
      %vm116 = vcmp.eq.s32.totalorder %v83, %v108
      %vm117 = vcmp.eq.s32.totalorder %v84, %v108
      %vm118 = vcmp.eq.s32.totalorder %v85, %v108
      %vm119 = vcmp.eq.s32.totalorder %v86, %v108
      %vm120 = vcmp.eq.s32.totalorder %v87, %v108
      %vm121 = vcmp.eq.s32.totalorder %v88, %v108
      %vm122 = vcmp.eq.s32.totalorder %v89, %v108
      %vm123 = vcmp.eq.s32.totalorder %v90, %v108
      %vm124 = vcmp.eq.s32.totalorder %v91, %v108
      %vm125 = vcmp.eq.s32.totalorder %v92, %v108
      %vm126 = vcmp.eq.s32.totalorder %v93, %v108
      %vm127 = vcmp.eq.s32.totalorder %v94, %v108
      %vm128 = vcmp.eq.s32.totalorder %v95, %v108
      %vm129 = vcmp.eq.s32.totalorder %v96, %v108
      %vm130 = vcmp.eq.s32.totalorder %v97, %v108
      %vm131 = vcmp.eq.s32.totalorder %v98, %v108
      %vm132 = vcmp.eq.s32.totalorder %v99, %v108
      %vm133 = vcmp.eq.s32.totalorder %v100, %v108
      %vm134 = vcmp.eq.s32.totalorder %v101, %v108
      %vm135 = vcmp.eq.s32.totalorder %v102, %v108
      %vm136 = vcmp.eq.s32.totalorder %v103, %v108
      %vm137 = vcmp.eq.s32.totalorder %v104, %v108
      %vm138 = vcmp.eq.s32.totalorder %v105, %v108
      %vm139 = vcmp.eq.s32.totalorder %v106, %v108
      %vm140 = vcmp.eq.s32.totalorder %v107, %v108
      %v141 = vsel %vm109, 1, 0
      %v142 = vsel %vm110, 1, 0
      %v143 = vsel %vm111, 1, 0
      %v144 = vsel %vm112, 1, 0
      %v145 = vsel %vm113, 1, 0
      %v146 = vsel %vm114, 1, 0
      %v147 = vsel %vm115, 1, 0
      %v148 = vsel %vm116, 1, 0
      %v149 = vsel %vm117, 1, 0
      %v150 = vsel %vm118, 1, 0
      %v151 = vsel %vm119, 1, 0
      %v152 = vsel %vm120, 1, 0
      %v153 = vsel %vm121, 1, 0
      %v154 = vsel %vm122, 1, 0
      %v155 = vsel %vm123, 1, 0
      %v156 = vsel %vm124, 1, 0
      %v157 = vsel %vm125, 1, 0
      %v158 = vsel %vm126, 1, 0
      %v159 = vsel %vm127, 1, 0
      %v160 = vsel %vm128, 1, 0
      %v161 = vsel %vm129, 1, 0
      %v162 = vsel %vm130, 1, 0
      %v163 = vsel %vm131, 1, 0
      %v164 = vsel %vm132, 1, 0
      %v165 = vsel %vm133, 1, 0
      %v166 = vsel %vm134, 1, 0
      %v167 = vsel %vm135, 1, 0
      %v168 = vsel %vm136, 1, 0
      %v169 = vsel %vm137, 1, 0
      %v170 = vsel %vm138, 1, 0
      %v171 = vsel %vm139, 1, 0
      %v172 = vsel %vm140, 1, 0
      %v173 = vcvt.s32.f32 %v141
      %v174 = vcvt.s32.f32 %v142
      %v175 = vcvt.s32.f32 %v143
      %v176 = vcvt.s32.f32 %v144
      %v177 = vcvt.s32.f32 %v145
      %v178 = vcvt.s32.f32 %v146
      %v179 = vcvt.s32.f32 %v147
      %v180 = vcvt.s32.f32 %v148
      %v181 = vcvt.s32.f32 %v149
      %v182 = vcvt.s32.f32 %v150
      %v183 = vcvt.s32.f32 %v151
      %v184 = vcvt.s32.f32 %v152
      %v185 = vcvt.s32.f32 %v153
      %v186 = vcvt.s32.f32 %v154
      %v187 = vcvt.s32.f32 %v155
      %v188 = vcvt.s32.f32 %v156
      %v189 = vcvt.s32.f32 %v157
      %v190 = vcvt.s32.f32 %v158
      %v191 = vcvt.s32.f32 %v159
      %v192 = vcvt.s32.f32 %v160
      %v193 = vcvt.s32.f32 %v161
      %v194 = vcvt.s32.f32 %v162
      %v195 = vcvt.s32.f32 %v163
      %v196 = vcvt.s32.f32 %v164
      %v197 = vcvt.s32.f32 %v165
      %v198 = vcvt.s32.f32 %v166
      %v199 = vcvt.s32.f32 %v167
      %v200 = vcvt.s32.f32 %v168
      %v201 = vcvt.s32.f32 %v169
      %v202 = vcvt.s32.f32 %v170
      %v203 = vcvt.s32.f32 %v171
      %v204 = vcvt.s32.f32 %v172
      %v205 = vld [vmem:[#allocation5] sm:$0x1]
      %v207 = vperm.slane %v70, 0
      %v208 = vperm.slane %v70, 1
      %211 = vmatpush.msra.mxu0 %v188
      %212 = vmatpush.msra.mxu0 %v187
      %213 = vmatpush.msra.mxu0 %v186
      %214 = vmatpush.msra.mxu0 %v185
      %215 = vmatpush.msra.mxu0 %v184
      %216 = vmatpush.msra.mxu0 %v183
      %217 = vmatpush.msra.mxu0 %v182
      %218 = vmatpush.msra.mxu0 %v181
      %219 = vmatpush.msra.mxu0 %v180
      %220 = vmatpush.msra.mxu0 %v179
      %221 = vmatpush.msra.mxu0 %v178
      %222 = vmatpush.msra.mxu0 %v177
      %223 = vmatpush.msra.mxu0 %v176
      %224 = vmatpush.msra.mxu0 %v175
      %225 = vmatpush.msra.mxu0 %v174
      %226 = vmatpush.msra.mxu0 %v173
      %227 = vmatmul.f32.gmra.mxu0 %v207
      %v228 = vpop.f32.mrf.mxu0
      %v229 = vadd.f32 0.0, %v228
      %230 = vdwg.mxu0
      %231 = vmatpush.msra.mxu0 %v204
      %232 = vmatpush.msra.mxu0 %v203
      %233 = vmatpush.msra.mxu0 %v202
      %234 = vmatpush.msra.mxu0 %v201
      %235 = vmatpush.msra.mxu0 %v200
      %236 = vmatpush.msra.mxu0 %v199
      %237 = vmatpush.msra.mxu0 %v198
      %238 = vmatpush.msra.mxu0 %v197
      %239 = vmatpush.msra.mxu0 %v196
      %240 = vmatpush.msra.mxu0 %v195
      %241 = vmatpush.msra.mxu0 %v194
      %242 = vmatpush.msra.mxu0 %v193
      %243 = vmatpush.msra.mxu0 %v192
      %244 = vmatpush.msra.mxu0 %v191
      %245 = vmatpush.msra.mxu0 %v190
      %246 = vmatpush.msra.mxu0 %v189
      %247 = vmatmul.f32.gmra.mxu0 %v208
      %v248 = vpop.f32.mrf.mxu0
      %v249 = vadd.f32 %v229, %v248
      %250 = vdwg.mxu0
      %v251 = vadd.f32 %v205, %v249
      %252 = vst [vmem:[#allocation5] sm:$0x1] %v251
      %v253 = vperm.slane %v74, 1
      %vm254 = vcmp.eq.s32.totalorder %v76, %v253
      %vm255 = vcmp.eq.s32.totalorder %v77, %v253
      %vm256 = vcmp.eq.s32.totalorder %v78, %v253
      %vm257 = vcmp.eq.s32.totalorder %v79, %v253
      %vm258 = vcmp.eq.s32.totalorder %v80, %v253
      %vm259 = vcmp.eq.s32.totalorder %v81, %v253
      %vm260 = vcmp.eq.s32.totalorder %v82, %v253
      %vm261 = vcmp.eq.s32.totalorder %v83, %v253
      %vm262 = vcmp.eq.s32.totalorder %v84, %v253
      %vm263 = vcmp.eq.s32.totalorder %v85, %v253
      %vm264 = vcmp.eq.s32.totalorder %v86, %v253
      %vm265 = vcmp.eq.s32.totalorder %v87, %v253
      %vm266 = vcmp.eq.s32.totalorder %v88, %v253
      %vm267 = vcmp.eq.s32.totalorder %v89, %v253
      %vm268 = vcmp.eq.s32.totalorder %v90, %v253
      %vm269 = vcmp.eq.s32.totalorder %v91, %v253
      %vm270 = vcmp.eq.s32.totalorder %v92, %v253
      %vm271 = vcmp.eq.s32.totalorder %v93, %v253
      %vm272 = vcmp.eq.s32.totalorder %v94, %v253
      %vm273 = vcmp.eq.s32.totalorder %v95, %v253
      %vm274 = vcmp.eq.s32.totalorder %v96, %v253
      %vm275 = vcmp.eq.s32.totalorder %v97, %v253
      %vm276 = vcmp.eq.s32.totalorder %v98, %v253
      %vm277 = vcmp.eq.s32.totalorder %v99, %v253
      %vm278 = vcmp.eq.s32.totalorder %v100, %v253
      %vm279 = vcmp.eq.s32.totalorder %v101, %v253
      %vm280 = vcmp.eq.s32.totalorder %v102, %v253
      %vm281 = vcmp.eq.s32.totalorder %v103, %v253
      %vm282 = vcmp.eq.s32.totalorder %v104, %v253
      %vm283 = vcmp.eq.s32.totalorder %v105, %v253
      %vm284 = vcmp.eq.s32.totalorder %v106, %v253
      %vm285 = vcmp.eq.s32.totalorder %v107, %v253
      %v286 = vsel %vm254, 1, 0
      %v287 = vsel %vm255, 1, 0
      %v288 = vsel %vm256, 1, 0
      %v289 = vsel %vm257, 1, 0
      %v290 = vsel %vm258, 1, 0
      %v291 = vsel %vm259, 1, 0
      %v292 = vsel %vm260, 1, 0
      %v293 = vsel %vm261, 1, 0
      %v294 = vsel %vm262, 1, 0
      %v295 = vsel %vm263, 1, 0
      %v296 = vsel %vm264, 1, 0
      %v297 = vsel %vm265, 1, 0
      %v298 = vsel %vm266, 1, 0
      %v299 = vsel %vm267, 1, 0
      %v300 = vsel %vm268, 1, 0
      %v301 = vsel %vm269, 1, 0
      %v302 = vsel %vm270, 1, 0
      %v303 = vsel %vm271, 1, 0
      %v304 = vsel %vm272, 1, 0
      %v305 = vsel %vm273, 1, 0
      %v306 = vsel %vm274, 1, 0
      %v307 = vsel %vm275, 1, 0
      %v308 = vsel %vm276, 1, 0
      %v309 = vsel %vm277, 1, 0
      %v310 = vsel %vm278, 1, 0
      %v311 = vsel %vm279, 1, 0
      %v312 = vsel %vm280, 1, 0
      %v313 = vsel %vm281, 1, 0
      %v314 = vsel %vm282, 1, 0
      %v315 = vsel %vm283, 1, 0
      %v316 = vsel %vm284, 1, 0
      %v317 = vsel %vm285, 1, 0
      %v318 = vcvt.s32.f32 %v286
      %v319 = vcvt.s32.f32 %v287
      %v320 = vcvt.s32.f32 %v288
      %v321 = vcvt.s32.f32 %v289
      %v322 = vcvt.s32.f32 %v290
      %v323 = vcvt.s32.f32 %v291
      %v324 = vcvt.s32.f32 %v292
      %v325 = vcvt.s32.f32 %v293
      %v326 = vcvt.s32.f32 %v294
      %v327 = vcvt.s32.f32 %v295
      %v328 = vcvt.s32.f32 %v296
      %v329 = vcvt.s32.f32 %v297
      %v330 = vcvt.s32.f32 %v298
      %v331 = vcvt.s32.f32 %v299
      %v332 = vcvt.s32.f32 %v300
      %v333 = vcvt.s32.f32 %v301
      %v334 = vcvt.s32.f32 %v302
      %v335 = vcvt.s32.f32 %v303
      %v336 = vcvt.s32.f32 %v304
      %v337 = vcvt.s32.f32 %v305
      %v338 = vcvt.s32.f32 %v306
      %v339 = vcvt.s32.f32 %v307
      %v340 = vcvt.s32.f32 %v308
      %v341 = vcvt.s32.f32 %v309
      %v342 = vcvt.s32.f32 %v310
      %v343 = vcvt.s32.f32 %v311
      %v344 = vcvt.s32.f32 %v312
      %v345 = vcvt.s32.f32 %v313
      %v346 = vcvt.s32.f32 %v314
      %v347 = vcvt.s32.f32 %v315
      %v348 = vcvt.s32.f32 %v316
      %v349 = vcvt.s32.f32 %v317
      %v350 = vld [vmem:[#allocation5 + $0x1] sm:$0x1]
      %351 = vmatpush.msra.mxu0 %v333
      %352 = vmatpush.msra.mxu0 %v332
      %353 = vmatpush.msra.mxu0 %v331
      %354 = vmatpush.msra.mxu0 %v330
      %355 = vmatpush.msra.mxu0 %v329
      %356 = vmatpush.msra.mxu0 %v328
      %357 = vmatpush.msra.mxu0 %v327
      %358 = vmatpush.msra.mxu0 %v326
      %359 = vmatpush.msra.mxu0 %v325
      %360 = vmatpush.msra.mxu0 %v324
      %361 = vmatpush.msra.mxu0 %v323
      %362 = vmatpush.msra.mxu0 %v322
      %363 = vmatpush.msra.mxu0 %v321
      %364 = vmatpush.msra.mxu0 %v320
      %365 = vmatpush.msra.mxu0 %v319
      %366 = vmatpush.msra.mxu0 %v318
      %367 = vmatmul.f32.gmra.mxu0 %v207
      %v368 = vpop.f32.mrf.mxu0
      %v369 = vadd.f32 0.0, %v368
      %370 = vdwg.mxu0
      %371 = vmatpush.msra.mxu0 %v349
      %372 = vmatpush.msra.mxu0 %v348
      %373 = vmatpush.msra.mxu0 %v347
      %374 = vmatpush.msra.mxu0 %v346
      %375 = vmatpush.msra.mxu0 %v345
      %376 = vmatpush.msra.mxu0 %v344
      %377 = vmatpush.msra.mxu0 %v343
      %378 = vmatpush.msra.mxu0 %v342
      %379 = vmatpush.msra.mxu0 %v341
      %380 = vmatpush.msra.mxu0 %v340
      %381 = vmatpush.msra.mxu0 %v339
      %382 = vmatpush.msra.mxu0 %v338
      %383 = vmatpush.msra.mxu0 %v337
      %384 = vmatpush.msra.mxu0 %v336
      %385 = vmatpush.msra.mxu0 %v335
      %386 = vmatpush.msra.mxu0 %v334
      %387 = vmatmul.f32.gmra.mxu0 %v208
      %v388 = vpop.f32.mrf.mxu0
      %v389 = vadd.f32 %v369, %v388
      %390 = vdwg.mxu0
      %v391 = vadd.f32 %v350, %v389
      %392 = vst [vmem:[#allocation5 + $0x1] sm:$0x1] %v391
    $region17: #{tpu_custom_call.1} parent=1 // pred_fallthru
      _
    // Predicated region
    $region18: #{tpu_custom_call.1} parent=1 // pred_check
      _
    $region19: #{tpu_custom_call.1} parent=1 // pred_check_branch
      %394 = sbr.rel (0) target = $region21
    $region20: #{tpu_custom_call.1} parent=1 // pred_region
      %396 = vsyncadd [#allocation6], 0
      %s398 = sshll.u32 [#allocation5], 4
      %s399 = int_to_ptr.vmem [resolvable:$true] %s398
      %s400 = sshll.u32 %s4, 4
      %s401 = int_to_ptr.hbm [resolvable:$true] %s400
      %403 = dma.vmem_to_hbm [thread:$0]  %s399, 32, %s401, [#allocation6]
    $region21: #{tpu_custom_call.1} parent=1 // pred_fallthru
      _
    // Predicated region
    $region22: #{tpu_custom_call.1} parent=1 // pred_check
      _
    $region23: #{tpu_custom_call.1} parent=1 // pred_check_branch
      %405 = sbr.rel (0) target = $region25
    $region24: #{tpu_custom_call.1} parent=1 // pred_region
      %407 = dma.done [#allocation6], 32
    $region25: #{tpu_custom_call.1} parent=1 // pred_fallthru
      _
    %408 = vsyncpa [#allocation6], 1

</llo_original>
